<compile_context>
chip_gen: v5e
topology: v5e:2x2
jax: 0.10.0
libtpu: 0.0.40
codegen_flags: <defaults>
</compile_context>

<pallas_src>
import functools
from math import ceil

import jax
import jax.numpy as jnp
import numpy as np
from jax.experimental import pallas as pl
from jax.experimental.pallas import tpu as pltpu


NUM_FEATURES = 10
HIDDEN = 30
NUM_CLASSES = 2
LANE = 128                      # padded hidden / class lane width


def _round_up(x, m):
    return int(ceil(x / m) * m)


def _vmem_capacity_bytes():
    try:
        return int(pltpu.get_tpu_info().vmem_capacity_bytes)
    except Exception:
        return 64 * 2**20       # conservative (v7x per-core VMEM)


# ---------------------------------------------------------------------------
# Kernel 1: GIN conv1 over one row tile of A_hat, with the conv2 weight fused
# into the epilogue:
#   h1_tile = relu( A_hat_tile @ (xW1) + b1 )
#   y_tile  = h1_tile @ W2                      (bf16, conv2 resident operand)
# ---------------------------------------------------------------------------
def conv1_kernel(a_ref, xw1_ref, b1_ref, w2_ref, y_ref):
    a = a_ref[...].astype(jnp.bfloat16)                    # int8 -> bf16 in-kernel
    h1 = jnp.dot(a, xw1_ref[...], preferred_element_type=jnp.float32) + b1_ref[...]
    h1 = jnp.maximum(h1, 0.0)
    y = jnp.dot(h1.astype(jnp.bfloat16), w2_ref[...],
                preferred_element_type=jnp.float32)
    y_ref[...] = y.astype(y_ref.dtype)


# ---------------------------------------------------------------------------
# Kernel 2: GIN conv2 + per-tile mean-pool partial.
#   h2_tile   = relu( A_hat_tile @ y + b2 )
#   partial_i = P_tile @ h2_tile                (written to its own block ->
#                                                grid axis stays "parallel")
# ---------------------------------------------------------------------------
def conv2_pool_kernel(a_ref, y_ref, b2_ref, p_ref, part_ref):
    a = a_ref[...].astype(jnp.bfloat16)
    h2 = jnp.dot(a, y_ref[...], preferred_element_type=jnp.float32) + b2_ref[...]
    h2 = jnp.maximum(h2, 0.0)
    part_ref[...] = jnp.dot(p_ref[...], h2, preferred_element_type=jnp.float32)


# ---------------------------------------------------------------------------
# Kernel 3 (one-shot): reduce pooled partials + lin1/relu + lin2 head.
# ---------------------------------------------------------------------------
def head_kernel(part_ref, wl1_ref, bl1_ref, wl2_ref, bl2_ref, out_ref):
    g = jnp.sum(part_ref[...], axis=0)                      # (GP, HP)
    o = jnp.maximum(
        jnp.dot(g, wl1_ref[...], preferred_element_type=jnp.float32) + bl1_ref[...],
        0.0)
    out_ref[...] = (jnp.dot(o, wl2_ref[...], preferred_element_type=jnp.float32)
                    + bl2_ref[...])


# ---------------------------------------------------------------------------
# Wrapper
# ---------------------------------------------------------------------------
@functools.partial(jax.jit, static_argnames=("num_graphs",))
def gin_forward(x, edge_index, batch, params, *, num_graphs):
    """x: (N, F) f32, edge_index: (2, E) i32, batch: (N,) i32."""
    n, f = x.shape

    vmem_cap = _vmem_capacity_bytes()
    # Row tile: small graphs -> 128; big graphs -> 512 on 128 MiB-VMEM chips
    # (v5e/v6e), else 256 (v7x: 64 MiB).
    if n <= 512:
        tm = 128
    elif n > 2048 and vmem_cap >= 100 * 2**20:
        tm = 512
    else:
        tm = 256

    NP = _round_up(max(n, tm), tm)
    GP = _round_up(num_graphs, 8)
    HP = CP = LANE
    nt = NP // tm

    # --- glue: A_hat = I + A built directly in int8 (exact small integers) ---
    src, dst = edge_index[0], edge_index[1]
    a = jnp.zeros((NP, NP), jnp.int8)
    a = a.at[dst, src].add(jnp.ones_like(dst, dtype=jnp.int8))
    diag = jnp.arange(n, dtype=jnp.int32)
    a = a.at[diag, diag].add(jnp.ones((n,), jnp.int8))

    # --- glue: mean-pool matrix P (GP, NP); padded nodes -> zero columns ---
    one_hot = (batch[None, :] == jnp.arange(num_graphs)[:, None]).astype(jnp.float32)
    counts = jnp.maximum(one_hot.sum(axis=1, keepdims=True), 1.0)
    p_pad = jnp.zeros((GP, NP), jnp.float32).at[:num_graphs, :n].set(one_hot / counts)

    # --- glue: xW1 precompute (tiny: (n,F)@(F,HIDDEN)); bf16 resident operand ---
    xw1 = x @ params["w1"]                                   # (n, HIDDEN) f32
    xw1_pad = (jnp.zeros((NP, HP), jnp.float32)
               .at[:n, :HIDDEN].set(xw1).astype(jnp.bfloat16))

    def pad_mat(w, r, c_, dtype=jnp.float32):
        return (jnp.zeros((r, c_), jnp.float32)
                .at[:w.shape[0], :w.shape[1]].set(w).astype(dtype))

    def pad_vec(b, c_):
        return jnp.zeros((1, c_), jnp.float32).at[0, :b.shape[0]].set(b)

    b1 = pad_vec(params["b1"], HP)
    w2 = pad_mat(params["w2"], HP, HP, jnp.bfloat16)
    b2 = pad_vec(params["b2"], HP)
    wl1 = pad_mat(params["wl1"], HP, HP)
    bl1 = pad_vec(params["bl1"], HP)
    wl2 = pad_mat(params["wl2"], HP, CP)
    bl2 = pad_vec(params["bl2"], CP)

    # --- VMEM budgets: only streamed blocks (A tile, outputs, P tile) are
    #     double-buffered; constant-index residents counted once. ---
    def b_i8(*d): return int(np.prod(d))
    def b_bf16(*d): return int(np.prod(d)) * 2
    def b_f32(*d): return int(np.prod(d)) * 4

    vmem1 = (2 * b_i8(tm, NP) + b_bf16(NP, HP) + b_f32(1, HP) + b_bf16(HP, HP)
             + 2 * b_bf16(tm, HP))
    vmem2 = (2 * b_i8(tm, NP) + b_bf16(NP, HP) + b_f32(1, HP)
             + 2 * b_f32(GP, tm) + 2 * b_f32(GP, HP))

    vmem_cap_req = (3 * vmem_cap) // 4          # leave headroom for Mosaic scratch

    def vmem_limit(need):
        return int(min(vmem_cap_req, max(16 * 2**20, 2 * need)))

    # --- conv1: row-tiled, "parallel" ---
    y = pl.pallas_call(
        conv1_kernel,
        out_shape=jax.ShapeDtypeStruct((NP, HP), jnp.bfloat16),
        grid=(nt,),
        in_specs=[
            pl.BlockSpec((tm, NP), lambda i: (i, 0)),    # A_hat row tile (int8)
            pl.BlockSpec((NP, HP), lambda i: (0, 0)),    # xW1 (resident, bf16)
            pl.BlockSpec((1, HP), lambda i: (0, 0)),     # b1
            pl.BlockSpec((HP, HP), lambda i: (0, 0)),    # W2 (bf16)
        ],
        out_specs=pl.BlockSpec((tm, HP), lambda i: (i, 0)),
        compiler_params=pltpu.CompilerParams(
            dimension_semantics=("parallel",),
            vmem_limit_bytes=vmem_limit(vmem1)),
        cost_estimate=pl.CostEstimate(
            flops=2 * NP * NP * HP + 2 * NP * HP * HP,
            transcendentals=0,
            bytes_accessed=(b_i8(NP, NP) + b_bf16(NP, HP) + b_f32(1, HP)
                            + b_bf16(HP, HP) + b_bf16(NP, HP))),
    )(a, xw1_pad, b1, w2)

    # --- conv2 + per-tile pooled partials: row-tiled, fully "parallel" ---
    partials = pl.pallas_call(
        conv2_pool_kernel,
        out_shape=jax.ShapeDtypeStruct((nt, GP, HP), jnp.float32),
        grid=(nt,),
        in_specs=[
            pl.BlockSpec((tm, NP), lambda i: (i, 0)),    # A_hat row tile (int8)
            pl.BlockSpec((NP, HP), lambda i: (0, 0)),    # y = h1@W2 (resident, bf16)
            pl.BlockSpec((1, HP), lambda i: (0, 0)),     # b2
            pl.BlockSpec((GP, tm), lambda i: (0, i)),    # P column tile
        ],
        out_specs=pl.BlockSpec((None, GP, HP), lambda i: (i, 0, 0)),
        compiler_params=pltpu.CompilerParams(
            dimension_semantics=("parallel",),
            vmem_limit_bytes=vmem_limit(vmem2)),
        cost_estimate=pl.CostEstimate(
            flops=2 * NP * NP * HP + 2 * GP * NP * HP,
            transcendentals=0,
            bytes_accessed=(b_i8(NP, NP) + b_bf16(NP, HP) + b_f32(GP, NP)
                            + b_f32(1, HP) + b_f32(nt, GP, HP))),
    )(a, y, b2, p_pad)

    # --- one-shot head: reduce partials + lin1/relu + lin2 (tiny) ---
    out = pl.pallas_call(
        head_kernel,
        out_shape=jax.ShapeDtypeStruct((GP, CP), jnp.float32),
    )(partials, wl1, bl1, wl2, bl2)

    return out[:num_graphs, :NUM_CLASSES]


# ---------------------------------------------------------------------------
# Deterministic parameter init (shapes from the module's __init__)
# ---------------------------------------------------------------------------
def init_params(key):
    ks = jax.random.split(key, 8)

    def lin(kw, kb, fan_in, fan_out):
        bound = 1.0 / np.sqrt(fan_in)
        w = jax.random.uniform(kw, (fan_in, fan_out), jnp.float32, -bound, bound)
        b = jax.random.uniform(kb, (fan_out,), jnp.float32, -bound, bound)
        return w, b

    w1, b1 = lin(ks[0], ks[1], NUM_FEATURES, HIDDEN)   # mlp1
    w2, b2 = lin(ks[2], ks[3], HIDDEN, HIDDEN)         # mlp2
    wl1, bl1 = lin(ks[4], ks[5], HIDDEN, HIDDEN)       # lin1
    wl2, bl2 = lin(ks[6], ks[7], HIDDEN, NUM_CLASSES)  # lin2
    return dict(w1=w1, b1=b1, w2=w2, b2=b2, wl1=wl1, bl1=bl1, wl2=wl2, bl2=bl2)


def reference_forward(x, edge_index, batch, params, num_graphs,
                      match_kernel_bf16=False):
    """Pure-JAX reference mirroring the PyTorch module.

    With match_kernel_bf16=True, it mirrors the kernel's reassociated
    computation and bf16 rounding points (A_hat is exact in int8/bf16), so the
    kernel can be checked with a tight tolerance.
    """
    n = x.shape[0]
    src, dst = edge_index[0], edge_index[1]
    a = jnp.zeros((n, n), jnp.float32).at[dst, src].add(1.0)
    a_hat = a + jnp.eye(n, dtype=jnp.float32)

    def rnd(t):
        return t.astype(jnp.bfloat16).astype(jnp.float32)

    if match_kernel_bf16:
        xw1 = rnd(x @ params["w1"])
        h1 = jax.nn.relu(a_hat @ xw1 + params["b1"])
        y = rnd(rnd(h1) @ rnd(params["w2"]))
        h2 = jax.nn.relu(a_hat @ y + params["b2"])
    else:
        h = x + a @ x
        h1 = jax.nn.relu(h @ params["w1"] + params["b1"])
        h = h1 + a @ h1
        h2 = jax.nn.relu(h @ params["w2"] + params["b2"])

    one_hot = (batch[None, :] == jnp.arange(num_graphs)[:, None]).astype(jnp.float32)
    g = (one_hot @ h2) / jnp.maximum(one_hot.sum(1, keepdims=True), 1.0)
    o = jax.nn.relu(g @ params["wl1"] + params["bl1"])
    return o @ params["wl2"] + params["bl2"]


if __name__ == "__main__":
    key = jax.random.PRNGKey(0)
    k_param, k_x, k_e = jax.random.split(key, 3)

    # Small synthetic batch: 2 graphs of 8 nodes each (N=16, F=10).
    N, E, G = 16, 40, 2
    x = jax.random.normal(k_x, (N, NUM_FEATURES), jnp.float32)
    batch = jnp.concatenate([jnp.zeros(8, jnp.int32), jnp.ones(8, jnp.int32)])

    # Random edges, kept within each graph.
    ke1, ke2 = jax.random.split(k_e)
    src = jax.random.randint(ke1, (E,), 0, 8)
    dst = jax.random.randint(ke2, (E,), 0, 8)
    graph_of_edge = (jnp.arange(E) % 2) * 8
    edge_index = jnp.stack([src + graph_of_edge, dst + graph_of_edge]).astype(jnp.int32)

    params = init_params(k_param)

    out = gin_forward(x, edge_index, batch, params, num_graphs=G)
    out = jax.block_until_ready(out)
    out_np = np.asarray(out)

    # Tight check against a reference mirroring the kernel's bf16 rounding.
    ref_bf16 = np.asarray(
        reference_forward(x, edge_index, batch, params, G, match_kernel_bf16=True))
    np.testing.assert_allclose(out_np, ref_bf16, rtol=2e-3, atol=2e-3)

    # Loose check against the exact f32 module semantics (bf16 rounding noise).
    ref_f32 = np.asarray(reference_forward(x, edge_index, batch, params, G))
    np.testing.assert_allclose(out_np, ref_f32, rtol=1e-1, atol=1e-1)

    assert out_np.shape == (G, NUM_CLASSES)
    print("KERNEL_OK")
</pallas_src>

<mosaic_0001>
module attributes {stable_mosaic.version = 11 : i64} {
  func.func @conv2_pool_kernel(%arg0: i32, %arg1: memref<128x128xi8, #tpu.memory_space<vmem>>, %arg2: memref<128x128xbf16, #tpu.memory_space<vmem>>, %arg3: memref<1x128xf32, #tpu.memory_space<vmem>>, %arg4: memref<8x128xf32, #tpu.memory_space<vmem>>, %arg5: memref<1x8x128xf32, #tpu.memory_space<vmem>>) attributes {dimension_semantics = [#tpu.dimension_semantics<parallel>], iteration_bounds = array<i64: 1>, scalar_prefetch = 0 : i64, scratch_operands = 0 : i64, tpu.core_type = #tpu.core_type<tc>, window_params = [{transform_indices = @transform_0, window_bounds = array<i64: 128, 128>}, {pipeline_mode = #tpu.pipeline_mode<synchronous>, transform_indices = @transform_1, window_bounds = array<i64: 128, 128>}, {pipeline_mode = #tpu.pipeline_mode<synchronous>, transform_indices = @transform_2, window_bounds = array<i64: 1, 128>}, {transform_indices = @transform_3, window_bounds = array<i64: 8, 128>}, {transform_indices = @transform_4, window_bounds = array<i64: 1, 8, 128>}]} {
    %c0 = arith.constant 0 : index
    %c0_0 = arith.constant 0 : index
    %0 = vector.load %arg1[%c0, %c0_0] : memref<128x128xi8, #tpu.memory_space<vmem>>, vector<128x128xi8>
    %1 = arith.sitofp %0 : vector<128x128xi8> to vector<128x128xbf16>
    %c0_1 = arith.constant 0 : index
    %c0_2 = arith.constant 0 : index
    %2 = vector.load %arg2[%c0_1, %c0_2] : memref<128x128xbf16, #tpu.memory_space<vmem>>, vector<128x128xbf16>
    %cst = arith.constant dense<0.000000e+00> : vector<128x128xf32>
    %3 = tpu.matmul %1, %2, %cst {dimension_numbers = #tpu.dot_dimension_numbers<[1], [0], [0], [1], [0, 0, 1, 1], [], []>} : vector<128x128xbf16>, vector<128x128xbf16>, vector<128x128xf32> -> vector<128x128xf32>
    %c0_3 = arith.constant 0 : index
    %c0_4 = arith.constant 0 : index
    %4 = vector.load %arg3[%c0_3, %c0_4] : memref<1x128xf32, #tpu.memory_space<vmem>>, vector<1x128xf32>
    %5 = vector.broadcast %4 : vector<1x128xf32> to vector<128x128xf32>
    %6 = arith.addf %3, %5 : vector<128x128xf32>
    %cst_5 = arith.constant 0.000000e+00 : f32
    %7 = vector.broadcast %cst_5 : f32 to vector<128x128xf32>
    %8 = arith.maximumf %6, %7 : vector<128x128xf32>
    %c0_6 = arith.constant 0 : index
    %c0_7 = arith.constant 0 : index
    %9 = vector.load %arg4[%c0_6, %c0_7] : memref<8x128xf32, #tpu.memory_space<vmem>>, vector<8x128xf32>
    %cst_8 = arith.constant dense<0.000000e+00> : vector<8x128xf32>
    %10 = tpu.matmul %9, %8, %cst_8 {dimension_numbers = #tpu.dot_dimension_numbers<[1], [0], [0], [1], [0, 0, 1, 1], [], []>} : vector<8x128xf32>, vector<128x128xf32>, vector<8x128xf32> -> vector<8x128xf32>
    %c0_9 = arith.constant 0 : index
    %c0_10 = arith.constant 0 : index
    %c0_11 = arith.constant 0 : index
    %11 = vector.load %arg5[%c0_9, %c0_10, %c0_11] : memref<1x8x128xf32, #tpu.memory_space<vmem>>, vector<1x8x128xf32>
    %12 = vector.shape_cast %11 : vector<1x8x128xf32> to vector<8x128xf32>
    %13 = vector.shape_cast %10 : vector<8x128xf32> to vector<1x8x128xf32>
    tpu.vector_store %arg5[%c0_9, %c0_10, %c0_11], %13 {strides = array<i32>} : memref<1x8x128xf32, #tpu.memory_space<vmem>>, vector<1x8x128xf32>,
    return
  }
  func.func @transform_0(%arg0: i32) -> (i32, i32) {
    %c0_i32 = arith.constant 0 : i32
    %c0_i32_0 = arith.constant 0 : i32
    return %arg0, %c0_i32 : i32, i32
  }
  func.func @transform_1(%arg0: i32) -> (i32, i32) {
    %c0_i32 = arith.constant 0 : i32
    %c0_i32_0 = arith.constant 0 : i32
    %c0_i32_1 = arith.constant 0 : i32
    return %c0_i32, %c0_i32_0 : i32, i32
  }
  func.func @transform_2(%arg0: i32) -> (i32, i32) {
    %c0_i32 = arith.constant 0 : i32
    %c0_i32_0 = arith.constant 0 : i32
    %c0_i32_1 = arith.constant 0 : i32
    return %c0_i32, %c0_i32_0 : i32, i32
  }
  func.func @transform_3(%arg0: i32) -> (i32, i32) {
    %c0_i32 = arith.constant 0 : i32
    %c0_i32_0 = arith.constant 0 : i32
    return %c0_i32, %arg0 : i32, i32
  }
  func.func @transform_4(%arg0: i32) -> (i32, i32, i32) {
    %c0_i32 = arith.constant 0 : i32
    %c0_i32_0 = arith.constant 0 : i32
    %c0_i32_1 = arith.constant 0 : i32
    return %arg0, %c0_i32, %c0_i32_0 : i32, i32, i32
  }
}

module attributes {stable_mosaic.version = 11 : i64} {
  func.func @conv1_kernel(%arg0: i32, %arg1: memref<128x128xi8, #tpu.memory_space<vmem>>, %arg2: memref<128x128xbf16, #tpu.memory_space<vmem>>, %arg3: memref<1x128xf32, #tpu.memory_space<vmem>>, %arg4: memref<128x128xbf16, #tpu.memory_space<vmem>>, %arg5: memref<128x128xbf16, #tpu.memory_space<vmem>>) attributes {dimension_semantics = [#tpu.dimension_semantics<parallel>], iteration_bounds = array<i64: 1>, scalar_prefetch = 0 : i64, scratch_operands = 0 : i64, tpu.core_type = #tpu.core_type<tc>, window_params = [{transform_indices = @transform_0, window_bounds = array<i64: 128, 128>}, {pipeline_mode = #tpu.pipeline_mode<synchronous>, transform_indices = @transform_1, window_bounds = array<i64: 128, 128>}, {pipeline_mode = #tpu.pipeline_mode<synchronous>, transform_indices = @transform_2, window_bounds = array<i64: 1, 128>}, {pipeline_mode = #tpu.pipeline_mode<synchronous>, transform_indices = @transform_3, window_bounds = array<i64: 128, 128>}, {transform_indices = @transform_4, window_bounds = array<i64: 128, 128>}]} {
    %c0 = arith.constant 0 : index
    %c0_0 = arith.constant 0 : index
    %0 = vector.load %arg1[%c0, %c0_0] : memref<128x128xi8, #tpu.memory_space<vmem>>, vector<128x128xi8>
    %1 = arith.sitofp %0 : vector<128x128xi8> to vector<128x128xbf16>
    %c0_1 = arith.constant 0 : index
    %c0_2 = arith.constant 0 : index
    %2 = vector.load %arg2[%c0_1, %c0_2] : memref<128x128xbf16, #tpu.memory_space<vmem>>, vector<128x128xbf16>
    %cst = arith.constant dense<0.000000e+00> : vector<128x128xf32>
    %3 = tpu.matmul %1, %2, %cst {dimension_numbers = #tpu.dot_dimension_numbers<[1], [0], [0], [1], [0, 0, 1, 1], [], []>} : vector<128x128xbf16>, vector<128x128xbf16>, vector<128x128xf32> -> vector<128x128xf32>
    %c0_3 = arith.constant 0 : index
    %c0_4 = arith.constant 0 : index
    %4 = vector.load %arg3[%c0_3, %c0_4] : memref<1x128xf32, #tpu.memory_space<vmem>>, vector<1x128xf32>
    %5 = vector.broadcast %4 : vector<1x128xf32> to vector<128x128xf32>
    %6 = arith.addf %3, %5 : vector<128x128xf32>
    %cst_5 = arith.constant 0.000000e+00 : f32
    %7 = vector.broadcast %cst_5 : f32 to vector<128x128xf32>
    %8 = arith.maximumf %6, %7 : vector<128x128xf32>
    %9 = arith.truncf %8 : vector<128x128xf32> to vector<128x128xbf16>
    %c0_6 = arith.constant 0 : index
    %c0_7 = arith.constant 0 : index
    %10 = vector.load %arg4[%c0_6, %c0_7] : memref<128x128xbf16, #tpu.memory_space<vmem>>, vector<128x128xbf16>
    %cst_8 = arith.constant dense<0.000000e+00> : vector<128x128xf32>
    %11 = tpu.matmul %9, %10, %cst_8 {dimension_numbers = #tpu.dot_dimension_numbers<[1], [0], [0], [1], [0, 0, 1, 1], [], []>} : vector<128x128xbf16>, vector<128x128xbf16>, vector<128x128xf32> -> vector<128x128xf32>
    %12 = arith.truncf %11 : vector<128x128xf32> to vector<128x128xbf16>
    %c0_9 = arith.constant 0 : index
    %c0_10 = arith.constant 0 : index
    %13 = vector.load %arg5[%c0_9, %c0_10] : memref<128x128xbf16, #tpu.memory_space<vmem>>, vector<128x128xbf16>
    tpu.vector_store %arg5[%c0_9, %c0_10], %12 {strides = array<i32>} : memref<128x128xbf16, #tpu.memory_space<vmem>>, vector<128x128xbf16>,
    return
  }
  func.func @transform_0(%arg0: i32) -> (i32, i32) {
    %c0_i32 = arith.constant 0 : i32
    %c0_i32_0 = arith.constant 0 : i32
    return %arg0, %c0_i32 : i32, i32
  }
  func.func @transform_1(%arg0: i32) -> (i32, i32) {
    %c0_i32 = arith.constant 0 : i32
    %c0_i32_0 = arith.constant 0 : i32
    %c0_i32_1 = arith.constant 0 : i32
    return %c0_i32, %c0_i32_0 : i32, i32
  }
  func.func @transform_2(%arg0: i32) -> (i32, i32) {
    %c0_i32 = arith.constant 0 : i32
    %c0_i32_0 = arith.constant 0 : i32
    %c0_i32_1 = arith.constant 0 : i32
    return %c0_i32, %c0_i32_0 : i32, i32
  }
  func.func @transform_3(%arg0: i32) -> (i32, i32) {
    %c0_i32 = arith.constant 0 : i32
    %c0_i32_0 = arith.constant 0 : i32
    %c0_i32_1 = arith.constant 0 : i32
    return %c0_i32, %c0_i32_0 : i32, i32
  }
  func.func @transform_4(%arg0: i32) -> (i32, i32) {
    %c0_i32 = arith.constant 0 : i32
    %c0_i32_0 = arith.constant 0 : i32
    return %arg0, %c0_i32 : i32, i32
  }
}

module attributes {stable_mosaic.version = 11 : i64} {
  func.func @head_kernel(%arg0: memref<1x8x128xf32, #tpu.memory_space<vmem>>, %arg1: memref<128x128xf32, #tpu.memory_space<vmem>>, %arg2: memref<1x128xf32, #tpu.memory_space<vmem>>, %arg3: memref<128x128xf32, #tpu.memory_space<vmem>>, %arg4: memref<1x128xf32, #tpu.memory_space<vmem>>, %arg5: memref<8x128xf32, #tpu.memory_space<vmem>>) attributes {dimension_semantics = [], scalar_prefetch = 0 : i64, scratch_operands = 0 : i64, tpu.core_type = #tpu.core_type<tc>} {
    %c0 = arith.constant 0 : index
    %c0_0 = arith.constant 0 : index
    %c0_1 = arith.constant 0 : index
    %0 = vector.load %arg0[%c0, %c0_0, %c0_1] : memref<1x8x128xf32, #tpu.memory_space<vmem>>, vector<1x8x128xf32>
    %cst = arith.constant dense<0.000000e+00> : vector<8x128xf32>
    %1 = vector.multi_reduction <add>, %0, %cst [0] : vector<1x8x128xf32> to vector<8x128xf32>
    %c0_2 = arith.constant 0 : index
    %c0_3 = arith.constant 0 : index
    %2 = vector.load %arg1[%c0_2, %c0_3] : memref<128x128xf32, #tpu.memory_space<vmem>>, vector<128x128xf32>
    %cst_4 = arith.constant dense<0.000000e+00> : vector<8x128xf32>
    %3 = tpu.matmul %1, %2, %cst_4 {dimension_numbers = #tpu.dot_dimension_numbers<[1], [0], [0], [1], [0, 0, 1, 1], [], []>} : vector<8x128xf32>, vector<128x128xf32>, vector<8x128xf32> -> vector<8x128xf32>
    %c0_5 = arith.constant 0 : index
    %c0_6 = arith.constant 0 : index
    %4 = vector.load %arg2[%c0_5, %c0_6] : memref<1x128xf32, #tpu.memory_space<vmem>>, vector<1x128xf32>
    %5 = vector.broadcast %4 : vector<1x128xf32> to vector<8x128xf32>
    %6 = arith.addf %3, %5 : vector<8x128xf32>
    %cst_7 = arith.constant 0.000000e+00 : f32
    %7 = vector.broadcast %cst_7 : f32 to vector<8x128xf32>
    %8 = arith.maximumf %6, %7 : vector<8x128xf32>
    %c0_8 = arith.constant 0 : index
    %c0_9 = arith.constant 0 : index
    %9 = vector.load %arg3[%c0_8, %c0_9] : memref<128x128xf32, #tpu.memory_space<vmem>>, vector<128x128xf32>
    %cst_10 = arith.constant dense<0.000000e+00> : vector<8x128xf32>
    %10 = tpu.matmul %8, %9, %cst_10 {dimension_numbers = #tpu.dot_dimension_numbers<[1], [0], [0], [1], [0, 0, 1, 1], [], []>} : vector<8x128xf32>, vector<128x128xf32>, vector<8x128xf32> -> vector<8x128xf32>
    %c0_11 = arith.constant 0 : index
    %c0_12 = arith.constant 0 : index
    %11 = vector.load %arg4[%c0_11, %c0_12] : memref<1x128xf32, #tpu.memory_space<vmem>>, vector<1x128xf32>
    %12 = vector.broadcast %11 : vector<1x128xf32> to vector<8x128xf32>
    %13 = arith.addf %10, %12 : vector<8x128xf32>
    %c0_13 = arith.constant 0 : index
    %c0_14 = arith.constant 0 : index
    %14 = vector.load %arg5[%c0_13, %c0_14] : memref<8x128xf32, #tpu.memory_space<vmem>>, vector<8x128xf32>
    tpu.vector_store %arg5[%c0_13, %c0_14], %13 {strides = array<i32>} : memref<8x128xf32, #tpu.memory_space<vmem>>, vector<8x128xf32>,
    return
  }
}

</mosaic_0001>

<llo_original>
// kernel: gin_forward.4
$region0: #{gin_forward.4}
  #allocation0 [shape = 'u32[]', space=smem, size = 0x4, offset = 0x4, fixed_abs, tag = 'smem constant byte address 0x4 - core index']
  #allocation1 [shape = 'u32[72,128]{1,0:T(1,128)}', space=vmem, size = 0x9000, scoped, tag = 'internal scratch']
  %s0 = inlined_call_operand.vmem [shape: s8[128,128], index: 0, kind: input, shape index: {}]
  %s1 = inlined_call_operand.vmem [shape: bf16[128,128], index: 1, kind: input, shape index: {}]
  %s2 = inlined_call_operand.vmem [shape: f32[1,128], index: 2, kind: input, shape index: {}]
  %s3 = inlined_call_operand.vmem [shape: f32[8,128], index: 3, kind: input, shape index: {}]
  %s4 = inlined_call_operand.vmem [shape: f32[1,8,128], index: 4, kind: output, shape index: {}]
  %s5 = sld [smem:[#allocation0]]
  $region26: #{gin_forward.4} parent=0
    _
  %s7 = ssub.s32 1, %s5
  %s8 = scalar_select 0, %s7, %s5
  // Predicated region
  $region2: #{gin_forward.4} parent=0 // pred_check
    _
  $region3: #{gin_forward.4} parent=0 // pred_check_branch
    %10 = sbr.rel (0) target = $region5
  $region4: #{gin_forward.4} parent=0 // pred_region
    _
  $region5: #{gin_forward.4} parent=0 // pred_fallthru
    _
  // Predicated region
  $region6: #{gin_forward.4} parent=0 // pred_check
    _
  $region7: #{gin_forward.4} parent=0 // pred_check_branch
    %12 = sbr.rel (0) target = $region9
  $region8: #{gin_forward.4} parent=0 // pred_region
    _
  $region9: #{gin_forward.4} parent=0 // pred_fallthru
    _
  // Predicated region
  $region10: #{gin_forward.4} parent=0 // pred_check
    _
  $region11: #{gin_forward.4} parent=0 // pred_check_branch
    %14 = sbr.rel (0) target = $region13
  $region12: #{gin_forward.4} parent=0 // pred_region
    _
  $region13: #{gin_forward.4} parent=0 // pred_fallthru
    _
  // Predicated region
  $region14: #{gin_forward.4} parent=0 // pred_check
    _
  $region15: #{gin_forward.4} parent=0 // pred_check_branch
    %16 = sbr.rel (0) target = $region17
  $region16: #{gin_forward.4} parent=0 // pred_region
    _
  $region17: #{gin_forward.4} parent=0 // pred_fallthru
    _
  %v17 = vld [vmem:[%s0] sm:$0x3]
  %v18 = vld [vmem:[%s0 + $0x2] sm:$0x3]
  %v19 = vld [vmem:[%s0 + $0x4] sm:$0x3]
  %v20 = vld [vmem:[%s0 + $0x6] sm:$0x3]
  %v21 = vld [vmem:[%s0 + $0x8] sm:$0x3]
  %v22 = vld [vmem:[%s0 + $0xa] sm:$0x3]
  %v23 = vld [vmem:[%s0 + $0xc] sm:$0x3]
  %v24 = vld [vmem:[%s0 + $0xe] sm:$0x3]
  %v25 = vld [vmem:[%s0 + $0x10] sm:$0x3]
  %v26 = vld [vmem:[%s0 + $0x12] sm:$0x3]
  %v27 = vld [vmem:[%s0 + $0x14] sm:$0x3]
  %v28 = vld [vmem:[%s0 + $0x16] sm:$0x3]
  %v29 = vld [vmem:[%s0 + $0x18] sm:$0x3]
  %v30 = vld [vmem:[%s0 + $0x1a] sm:$0x3]
  %v31 = vld [vmem:[%s0 + $0x1c] sm:$0x3]
  %v32 = vld [vmem:[%s0 + $0x1e] sm:$0x3]
  %v33 = vunpack.c.0.s8 %v17
  %v34 = vunpack.c.0.s8 %v18
  %v35 = vunpack.c.0.s8 %v19
  %v36 = vunpack.c.0.s8 %v20
  %v37 = vunpack.c.0.s8 %v21
  %v38 = vunpack.c.0.s8 %v22
  %v39 = vunpack.c.0.s8 %v23
  %v40 = vunpack.c.0.s8 %v24
  %v41 = vunpack.c.0.s8 %v25
  %v42 = vunpack.c.0.s8 %v26
  %v43 = vunpack.c.0.s8 %v27
  %v44 = vunpack.c.0.s8 %v28
  %v45 = vunpack.c.0.s8 %v29
  %v46 = vunpack.c.0.s8 %v30
  %v47 = vunpack.c.0.s8 %v31
  %v48 = vunpack.c.0.s8 %v32
  %v49 = vcvt.s32.f32 %v33
  %v50 = vcvt.s32.f32 %v34
  %v51 = vcvt.s32.f32 %v35
  %v52 = vcvt.s32.f32 %v36
  %v53 = vcvt.s32.f32 %v37
  %v54 = vcvt.s32.f32 %v38
  %v55 = vcvt.s32.f32 %v39
  %v56 = vcvt.s32.f32 %v40
  %v57 = vcvt.s32.f32 %v41
  %v58 = vcvt.s32.f32 %v42
  %v59 = vcvt.s32.f32 %v43
  %v60 = vcvt.s32.f32 %v44
  %v61 = vcvt.s32.f32 %v45
  %v62 = vcvt.s32.f32 %v46
  %v63 = vcvt.s32.f32 %v47
  %v64 = vcvt.s32.f32 %v48
  %v65 = vpack.c.bf16 %v50, %v49
  %v66 = vpack.c.bf16 %v52, %v51
  %v67 = vpack.c.bf16 %v54, %v53
  %v68 = vpack.c.bf16 %v56, %v55
  %v69 = vpack.c.bf16 %v58, %v57
  %v70 = vpack.c.bf16 %v60, %v59
  %v71 = vpack.c.bf16 %v62, %v61
  %v72 = vpack.c.bf16 %v64, %v63
  %v73 = vld [vmem:[%s1] sm:$0xf]
  %v74 = vld [vmem:[%s1 + $0x4] sm:$0xf]
  %v75 = vld [vmem:[%s1 + $0x8] sm:$0xf]
  %v76 = vld [vmem:[%s1 + $0xc] sm:$0xf]
  %v77 = vld [vmem:[%s1 + $0x10] sm:$0xf]
  %v78 = vld [vmem:[%s1 + $0x14] sm:$0xf]
  %v79 = vld [vmem:[%s1 + $0x18] sm:$0xf]
  %v80 = vld [vmem:[%s1 + $0x1c] sm:$0xf]
  %v81 = vld [vmem:[%s1 + $0x20] sm:$0xf]
  %v82 = vld [vmem:[%s1 + $0x24] sm:$0xf]
  %v83 = vld [vmem:[%s1 + $0x28] sm:$0xf]
  %v84 = vld [vmem:[%s1 + $0x2c] sm:$0xf]
  %v85 = vld [vmem:[%s1 + $0x30] sm:$0xf]
  %v86 = vld [vmem:[%s1 + $0x34] sm:$0xf]
  %v87 = vld [vmem:[%s1 + $0x38] sm:$0xf]
  %v88 = vld [vmem:[%s1 + $0x3c] sm:$0xf]
  %v89 = vld [vmem:[%s2] sm:$0x1]
  %v91 = vperm.slane %v89, 0
  %v109 = vunpack.c.l.b16 %v73
  %v110 = vunpack.c.l.b16 %v74
  %v111 = vunpack.c.l.b16 %v75
  %v112 = vunpack.c.l.b16 %v76
  %v113 = vunpack.c.l.b16 %v77
  %v114 = vunpack.c.l.b16 %v78
  %v115 = vunpack.c.l.b16 %v79
  %v116 = vunpack.c.l.b16 %v80
  %v117 = vunpack.c.l.b16 %v81
  %v118 = vunpack.c.l.b16 %v82
  %v119 = vunpack.c.l.b16 %v83
  %v120 = vunpack.c.l.b16 %v84
  %v121 = vunpack.c.l.b16 %v85
  %v122 = vunpack.c.l.b16 %v86
  %v123 = vunpack.c.l.b16 %v87
  %v124 = vunpack.c.l.b16 %v88
  %v125 = vpack.c.b16 %v110, %v109
  %v126 = vpack.c.b16 %v112, %v111
  %v127 = vpack.c.b16 %v114, %v113
  %v128 = vpack.c.b16 %v116, %v115
  %v129 = vpack.c.b16 %v118, %v117
  %v130 = vpack.c.b16 %v120, %v119
  %v131 = vpack.c.b16 %v122, %v121
  %v132 = vpack.c.b16 %v124, %v123
  %141 = vmatpush.bf16.msra.mxu0 %v132
  %142 = vmatpush.bf16.msra.mxu0 %v131
  %143 = vmatpush.bf16.msra.mxu0 %v130
  %144 = vmatpush.bf16.msra.mxu0 %v129
  %145 = vmatpush.bf16.msra.mxu0 %v128
  %146 = vmatpush.bf16.msra.mxu0 %v127
  %147 = vmatpush.bf16.msra.mxu0 %v126
  %148 = vmatpush.bf16.msra.mxu0 %v125
  %149 = vmatmul.bf16.gmra.mxu0 %v65
  %v150 = vpop.f32.mrf.mxu0
  %v151 = vadd.f32 %v91, %v150
  %v152 = vpop.f32.mrf.mxu0
  %v153 = vadd.f32 %v91, %v152
  %154 = vmatmul.bf16.gmra.mxu0 %v66
  %v155 = vpop.f32.mrf.mxu0
  %v156 = vadd.f32 %v91, %v155
  %v157 = vpop.f32.mrf.mxu0
  %v158 = vadd.f32 %v91, %v157
  %159 = vmatmul.bf16.gmra.mxu0 %v67
  %v160 = vpop.f32.mrf.mxu0
  %v161 = vadd.f32 %v91, %v160
  %v162 = vpop.f32.mrf.mxu0
  %v163 = vadd.f32 %v91, %v162
  %164 = vmatmul.bf16.gmra.mxu0 %v68
  %v165 = vpop.f32.mrf.mxu0
  %v166 = vadd.f32 %v91, %v165
  %v167 = vpop.f32.mrf.mxu0
  %v168 = vadd.f32 %v91, %v167
  %169 = vmatmul.bf16.gmra.mxu0 %v69
  %v170 = vpop.f32.mrf.mxu0
  %v171 = vadd.f32 %v91, %v170
  %v172 = vpop.f32.mrf.mxu0
  %v173 = vadd.f32 %v91, %v172
  %174 = vmatmul.bf16.gmra.mxu0 %v70
  %v175 = vpop.f32.mrf.mxu0
  %v176 = vadd.f32 %v91, %v175
  %v177 = vpop.f32.mrf.mxu0
  %v178 = vadd.f32 %v91, %v177
  %179 = vmatmul.bf16.gmra.mxu0 %v71
  %v180 = vpop.f32.mrf.mxu0
  %v181 = vadd.f32 %v91, %v180
  %v182 = vpop.f32.mrf.mxu0
  %v183 = vadd.f32 %v91, %v182
  %184 = vmatmul.bf16.gmra.mxu0 %v72
  %v185 = vpop.f32.mrf.mxu0
  %v186 = vadd.f32 %v91, %v185
  %v187 = vpop.f32.mrf.mxu0
  %v188 = vadd.f32 %v91, %v187
  %189 = vdwg.mxu0
  %v190 = vmax.f32 %v151, 0.0
  %v191 = vmax.f32 %v153, 0.0
  %v192 = vmax.f32 %v156, 0.0
  %v193 = vmax.f32 %v158, 0.0
  %v194 = vmax.f32 %v161, 0.0
  %v195 = vmax.f32 %v163, 0.0
  %v196 = vmax.f32 %v166, 0.0
  %v197 = vmax.f32 %v168, 0.0
  %v198 = vmax.f32 %v171, 0.0
  %v199 = vmax.f32 %v173, 0.0
  %v200 = vmax.f32 %v176, 0.0
  %v201 = vmax.f32 %v178, 0.0
  %v202 = vmax.f32 %v181, 0.0
  %v203 = vmax.f32 %v183, 0.0
  %v204 = vmax.f32 %v186, 0.0
  %v205 = vmax.f32 %v188, 0.0
  %v206 = vld [vmem:[%s3] sm:$0xff]
  %207 = vmatpush.msra.mxu0 %v205
  %208 = vmatpush.msra.mxu0 %v204
  %209 = vmatpush.msra.mxu0 %v203
  %210 = vmatpush.msra.mxu0 %v202
  %211 = vmatpush.msra.mxu0 %v201
  %212 = vmatpush.msra.mxu0 %v200
  %213 = vmatpush.msra.mxu0 %v199
  %214 = vmatpush.msra.mxu0 %v198
  %215 = vmatpush.msra.mxu0 %v197
  %216 = vmatpush.msra.mxu0 %v196
  %217 = vmatpush.msra.mxu0 %v195
  %218 = vmatpush.msra.mxu0 %v194
  %219 = vmatpush.msra.mxu0 %v193
  %220 = vmatpush.msra.mxu0 %v192
  %221 = vmatpush.msra.mxu0 %v191
  %222 = vmatpush.msra.mxu0 %v190
  %223 = vmatmul.f32.gmra.mxu0 %v206
  %v224 = vpop.f32.mrf.mxu0
  %v225 = vadd.f32 0.0, %v224
  %226 = vdwg.mxu0
  %227 = vst [vmem:[%s4] sm:$0xff] %v225
  // Predicated region
  $region18: #{gin_forward.4} parent=0 // pred_check
    _
  $region19: #{gin_forward.4} parent=0 // pred_check_branch
    %229 = sbr.rel (0) target = $region21
  $region20: #{gin_forward.4} parent=0 // pred_region
    _
  $region21: #{gin_forward.4} parent=0 // pred_fallthru
    _
  // Predicated region
  $region22: #{gin_forward.4} parent=0 // pred_check
    _
  $region23: #{gin_forward.4} parent=0 // pred_check_branch
    %231 = sbr.rel (0) target = $region25
  $region24: #{gin_forward.4} parent=0 // pred_region
    _
  $region25: #{gin_forward.4} parent=0 // pred_fallthru
    _

// kernel: gin_forward.3
$region0: #{gin_forward.3}
  #allocation0 [shape = 'u32[]', space=smem, size = 0x4, offset = 0x4, fixed_abs, tag = 'smem constant byte address 0x4 - core index']
  #allocation1 [shape = 'u32[72,128]{1,0:T(1,128)}', space=vmem, size = 0x9000, scoped, tag = 'internal scratch']
  %s0 = inlined_call_operand.vmem [shape: s8[128,128], index: 0, kind: input, shape index: {}]
  %s1 = inlined_call_operand.vmem [shape: bf16[128,128], index: 1, kind: input, shape index: {}]
  %s2 = inlined_call_operand.vmem [shape: f32[1,128], index: 2, kind: input, shape index: {}]
  %s3 = inlined_call_operand.vmem [shape: bf16[128,128], index: 3, kind: input, shape index: {}]
  %s4 = inlined_call_operand.vmem [shape: bf16[128,128], index: 4, kind: output, shape index: {}]
  %s5 = sld [smem:[#allocation0]]
  $region26: #{gin_forward.3} parent=0
    _
  %s7 = ssub.s32 1, %s5
  %s8 = scalar_select 0, %s7, %s5
  // Predicated region
  $region2: #{gin_forward.3} parent=0 // pred_check
    _
  $region3: #{gin_forward.3} parent=0 // pred_check_branch
    %10 = sbr.rel (0) target = $region5
  $region4: #{gin_forward.3} parent=0 // pred_region
    _
  $region5: #{gin_forward.3} parent=0 // pred_fallthru
    _
  // Predicated region
  $region6: #{gin_forward.3} parent=0 // pred_check
    _
  $region7: #{gin_forward.3} parent=0 // pred_check_branch
    %12 = sbr.rel (0) target = $region9
  $region8: #{gin_forward.3} parent=0 // pred_region
    _
  $region9: #{gin_forward.3} parent=0 // pred_fallthru
    _
  // Predicated region
  $region10: #{gin_forward.3} parent=0 // pred_check
    _
  $region11: #{gin_forward.3} parent=0 // pred_check_branch
    %14 = sbr.rel (0) target = $region13
  $region12: #{gin_forward.3} parent=0 // pred_region
    _
  $region13: #{gin_forward.3} parent=0 // pred_fallthru
    _
  // Predicated region
  $region14: #{gin_forward.3} parent=0 // pred_check
    _
  $region15: #{gin_forward.3} parent=0 // pred_check_branch
    %16 = sbr.rel (0) target = $region17
  $region16: #{gin_forward.3} parent=0 // pred_region
    _
  $region17: #{gin_forward.3} parent=0 // pred_fallthru
    _
  %v17 = vld [vmem:[%s0] sm:$0x3]
  %v18 = vld [vmem:[%s0 + $0x2] sm:$0x3]
  %v19 = vld [vmem:[%s0 + $0x4] sm:$0x3]
  %v20 = vld [vmem:[%s0 + $0x6] sm:$0x3]
  %v21 = vld [vmem:[%s0 + $0x8] sm:$0x3]
  %v22 = vld [vmem:[%s0 + $0xa] sm:$0x3]
  %v23 = vld [vmem:[%s0 + $0xc] sm:$0x3]
  %v24 = vld [vmem:[%s0 + $0xe] sm:$0x3]
  %v25 = vld [vmem:[%s0 + $0x10] sm:$0x3]
  %v26 = vld [vmem:[%s0 + $0x12] sm:$0x3]
  %v27 = vld [vmem:[%s0 + $0x14] sm:$0x3]
  %v28 = vld [vmem:[%s0 + $0x16] sm:$0x3]
  %v29 = vld [vmem:[%s0 + $0x18] sm:$0x3]
  %v30 = vld [vmem:[%s0 + $0x1a] sm:$0x3]
  %v31 = vld [vmem:[%s0 + $0x1c] sm:$0x3]
  %v32 = vld [vmem:[%s0 + $0x1e] sm:$0x3]
  %v33 = vunpack.c.0.s8 %v17
  %v34 = vunpack.c.0.s8 %v18
  %v35 = vunpack.c.0.s8 %v19
  %v36 = vunpack.c.0.s8 %v20
  %v37 = vunpack.c.0.s8 %v21
  %v38 = vunpack.c.0.s8 %v22
  %v39 = vunpack.c.0.s8 %v23
  %v40 = vunpack.c.0.s8 %v24
  %v41 = vunpack.c.0.s8 %v25
  %v42 = vunpack.c.0.s8 %v26
  %v43 = vunpack.c.0.s8 %v27
  %v44 = vunpack.c.0.s8 %v28
  %v45 = vunpack.c.0.s8 %v29
  %v46 = vunpack.c.0.s8 %v30
  %v47 = vunpack.c.0.s8 %v31
  %v48 = vunpack.c.0.s8 %v32
  %v49 = vcvt.s32.f32 %v33
  %v50 = vcvt.s32.f32 %v34
  %v51 = vcvt.s32.f32 %v35
  %v52 = vcvt.s32.f32 %v36
  %v53 = vcvt.s32.f32 %v37
  %v54 = vcvt.s32.f32 %v38
  %v55 = vcvt.s32.f32 %v39
  %v56 = vcvt.s32.f32 %v40
  %v57 = vcvt.s32.f32 %v41
  %v58 = vcvt.s32.f32 %v42
  %v59 = vcvt.s32.f32 %v43
  %v60 = vcvt.s32.f32 %v44
  %v61 = vcvt.s32.f32 %v45
  %v62 = vcvt.s32.f32 %v46
  %v63 = vcvt.s32.f32 %v47
  %v64 = vcvt.s32.f32 %v48
  %v65 = vpack.c.bf16 %v50, %v49
  %v66 = vpack.c.bf16 %v52, %v51
  %v67 = vpack.c.bf16 %v54, %v53
  %v68 = vpack.c.bf16 %v56, %v55
  %v69 = vpack.c.bf16 %v58, %v57
  %v70 = vpack.c.bf16 %v60, %v59
  %v71 = vpack.c.bf16 %v62, %v61
  %v72 = vpack.c.bf16 %v64, %v63
  %v73 = vld [vmem:[%s1] sm:$0xf]
  %v74 = vld [vmem:[%s1 + $0x4] sm:$0xf]
  %v75 = vld [vmem:[%s1 + $0x8] sm:$0xf]
  %v76 = vld [vmem:[%s1 + $0xc] sm:$0xf]
  %v77 = vld [vmem:[%s1 + $0x10] sm:$0xf]
  %v78 = vld [vmem:[%s1 + $0x14] sm:$0xf]
  %v79 = vld [vmem:[%s1 + $0x18] sm:$0xf]
  %v80 = vld [vmem:[%s1 + $0x1c] sm:$0xf]
  %v81 = vld [vmem:[%s1 + $0x20] sm:$0xf]
  %v82 = vld [vmem:[%s1 + $0x24] sm:$0xf]
  %v83 = vld [vmem:[%s1 + $0x28] sm:$0xf]
  %v84 = vld [vmem:[%s1 + $0x2c] sm:$0xf]
  %v85 = vld [vmem:[%s1 + $0x30] sm:$0xf]
  %v86 = vld [vmem:[%s1 + $0x34] sm:$0xf]
  %v87 = vld [vmem:[%s1 + $0x38] sm:$0xf]
  %v88 = vld [vmem:[%s1 + $0x3c] sm:$0xf]
  %v89 = vld [vmem:[%s2] sm:$0x1]
  %v91 = vperm.slane %v89, 0
  %v109 = vunpack.c.l.b16 %v73
  %v110 = vunpack.c.l.b16 %v74
  %v111 = vunpack.c.l.b16 %v75
  %v112 = vunpack.c.l.b16 %v76
  %v113 = vunpack.c.l.b16 %v77
  %v114 = vunpack.c.l.b16 %v78
  %v115 = vunpack.c.l.b16 %v79
  %v116 = vunpack.c.l.b16 %v80
  %v117 = vunpack.c.l.b16 %v81
  %v118 = vunpack.c.l.b16 %v82
  %v119 = vunpack.c.l.b16 %v83
  %v120 = vunpack.c.l.b16 %v84
  %v121 = vunpack.c.l.b16 %v85
  %v122 = vunpack.c.l.b16 %v86
  %v123 = vunpack.c.l.b16 %v87
  %v124 = vunpack.c.l.b16 %v88
  %v125 = vpack.c.b16 %v110, %v109
  %v126 = vpack.c.b16 %v112, %v111
  %v127 = vpack.c.b16 %v114, %v113
  %v128 = vpack.c.b16 %v116, %v115
  %v129 = vpack.c.b16 %v118, %v117
  %v130 = vpack.c.b16 %v120, %v119
  %v131 = vpack.c.b16 %v122, %v121
  %v132 = vpack.c.b16 %v124, %v123
  %141 = vmatpush.bf16.msra.mxu0 %v132
  %142 = vmatpush.bf16.msra.mxu0 %v131
  %143 = vmatpush.bf16.msra.mxu0 %v130
  %144 = vmatpush.bf16.msra.mxu0 %v129
  %145 = vmatpush.bf16.msra.mxu0 %v128
  %146 = vmatpush.bf16.msra.mxu0 %v127
  %147 = vmatpush.bf16.msra.mxu0 %v126
  %148 = vmatpush.bf16.msra.mxu0 %v125
  %149 = vmatmul.bf16.gmra.mxu0 %v65
  %v150 = vpop.f32.mrf.mxu0
  %v151 = vadd.f32 %v91, %v150
  %v152 = vpop.f32.mrf.mxu0
  %v153 = vadd.f32 %v91, %v152
  %154 = vmatmul.bf16.gmra.mxu0 %v66
  %v155 = vpop.f32.mrf.mxu0
  %v156 = vadd.f32 %v91, %v155
  %v157 = vpop.f32.mrf.mxu0
  %v158 = vadd.f32 %v91, %v157
  %159 = vmatmul.bf16.gmra.mxu0 %v67
  %v160 = vpop.f32.mrf.mxu0
  %v161 = vadd.f32 %v91, %v160
  %v162 = vpop.f32.mrf.mxu0
  %v163 = vadd.f32 %v91, %v162
  %164 = vmatmul.bf16.gmra.mxu0 %v68
  %v165 = vpop.f32.mrf.mxu0
  %v166 = vadd.f32 %v91, %v165
  %v167 = vpop.f32.mrf.mxu0
  %v168 = vadd.f32 %v91, %v167
  %169 = vmatmul.bf16.gmra.mxu0 %v69
  %v170 = vpop.f32.mrf.mxu0
  %v171 = vadd.f32 %v91, %v170
  %v172 = vpop.f32.mrf.mxu0
  %v173 = vadd.f32 %v91, %v172
  %174 = vmatmul.bf16.gmra.mxu0 %v70
  %v175 = vpop.f32.mrf.mxu0
  %v176 = vadd.f32 %v91, %v175
  %v177 = vpop.f32.mrf.mxu0
  %v178 = vadd.f32 %v91, %v177
  %179 = vmatmul.bf16.gmra.mxu0 %v71
  %v180 = vpop.f32.mrf.mxu0
  %v181 = vadd.f32 %v91, %v180
  %v182 = vpop.f32.mrf.mxu0
  %v183 = vadd.f32 %v91, %v182
  %184 = vmatmul.bf16.gmra.mxu0 %v72
  %v185 = vpop.f32.mrf.mxu0
  %v186 = vadd.f32 %v91, %v185
  %v187 = vpop.f32.mrf.mxu0
  %v188 = vadd.f32 %v91, %v187
  %189 = vdwg.mxu0
  %v190 = vmax.f32 %v151, 0.0
  %v191 = vmax.f32 %v153, 0.0
  %v192 = vmax.f32 %v156, 0.0
  %v193 = vmax.f32 %v158, 0.0
  %v194 = vmax.f32 %v161, 0.0
  %v195 = vmax.f32 %v163, 0.0
  %v196 = vmax.f32 %v166, 0.0
  %v197 = vmax.f32 %v168, 0.0
  %v198 = vmax.f32 %v171, 0.0
  %v199 = vmax.f32 %v173, 0.0
  %v200 = vmax.f32 %v176, 0.0
  %v201 = vmax.f32 %v178, 0.0
  %v202 = vmax.f32 %v181, 0.0
  %v203 = vmax.f32 %v183, 0.0
  %v204 = vmax.f32 %v186, 0.0
  %v205 = vmax.f32 %v188, 0.0
  %v206 = vpack.c.bf16 %v191, %v190
  %v207 = vpack.c.bf16 %v193, %v192
  %v208 = vpack.c.bf16 %v195, %v194
  %v209 = vpack.c.bf16 %v197, %v196
  %v210 = vpack.c.bf16 %v199, %v198
  %v211 = vpack.c.bf16 %v201, %v200
  %v212 = vpack.c.bf16 %v203, %v202
  %v213 = vpack.c.bf16 %v205, %v204
  %v214 = vld [vmem:[%s3] sm:$0xf]
  %v215 = vld [vmem:[%s3 + $0x4] sm:$0xf]
  %v216 = vld [vmem:[%s3 + $0x8] sm:$0xf]
  %v217 = vld [vmem:[%s3 + $0xc] sm:$0xf]
  %v218 = vld [vmem:[%s3 + $0x10] sm:$0xf]
  %v219 = vld [vmem:[%s3 + $0x14] sm:$0xf]
  %v220 = vld [vmem:[%s3 + $0x18] sm:$0xf]
  %v221 = vld [vmem:[%s3 + $0x1c] sm:$0xf]
  %v222 = vld [vmem:[%s3 + $0x20] sm:$0xf]
  %v223 = vld [vmem:[%s3 + $0x24] sm:$0xf]
  %v224 = vld [vmem:[%s3 + $0x28] sm:$0xf]
  %v225 = vld [vmem:[%s3 + $0x2c] sm:$0xf]
  %v226 = vld [vmem:[%s3 + $0x30] sm:$0xf]
  %v227 = vld [vmem:[%s3 + $0x34] sm:$0xf]
  %v228 = vld [vmem:[%s3 + $0x38] sm:$0xf]
  %v229 = vld [vmem:[%s3 + $0x3c] sm:$0xf]
  %v246 = vunpack.c.l.b16 %v214
  %v247 = vunpack.c.l.b16 %v215
  %v248 = vunpack.c.l.b16 %v216
  %v249 = vunpack.c.l.b16 %v217
  %v250 = vunpack.c.l.b16 %v218
  %v251 = vunpack.c.l.b16 %v219
  %v252 = vunpack.c.l.b16 %v220
  %v253 = vunpack.c.l.b16 %v221
  %v254 = vunpack.c.l.b16 %v222
  %v255 = vunpack.c.l.b16 %v223
  %v256 = vunpack.c.l.b16 %v224
  %v257 = vunpack.c.l.b16 %v225
  %v258 = vunpack.c.l.b16 %v226
  %v259 = vunpack.c.l.b16 %v227
  %v260 = vunpack.c.l.b16 %v228
  %v261 = vunpack.c.l.b16 %v229
  %v262 = vpack.c.b16 %v247, %v246
  %v263 = vpack.c.b16 %v249, %v248
  %v264 = vpack.c.b16 %v251, %v250
  %v265 = vpack.c.b16 %v253, %v252
  %v266 = vpack.c.b16 %v255, %v254
  %v267 = vpack.c.b16 %v257, %v256
  %v268 = vpack.c.b16 %v259, %v258
  %v269 = vpack.c.b16 %v261, %v260
  %278 = vmatpush.bf16.msra.mxu0 %v269
  %279 = vmatpush.bf16.msra.mxu0 %v268
  %280 = vmatpush.bf16.msra.mxu0 %v267
  %281 = vmatpush.bf16.msra.mxu0 %v266
  %282 = vmatpush.bf16.msra.mxu0 %v265
  %283 = vmatpush.bf16.msra.mxu0 %v264
  %284 = vmatpush.bf16.msra.mxu0 %v263
  %285 = vmatpush.bf16.msra.mxu0 %v262
  %286 = vmatmul.bf16.gmra.mxu0 %v206
  %v287 = vpop.f32.mrf.mxu0
  %v288 = vadd.f32 0.0, %v287
  %v289 = vpop.f32.mrf.mxu0
  %v290 = vadd.f32 0.0, %v289
  %291 = vmatmul.bf16.gmra.mxu0 %v207
  %v292 = vpop.f32.mrf.mxu0
  %v293 = vadd.f32 0.0, %v292
  %v294 = vpop.f32.mrf.mxu0
  %v295 = vadd.f32 0.0, %v294
  %296 = vmatmul.bf16.gmra.mxu0 %v208
  %v297 = vpop.f32.mrf.mxu0
  %v298 = vadd.f32 0.0, %v297
  %v299 = vpop.f32.mrf.mxu0
  %v300 = vadd.f32 0.0, %v299
  %301 = vmatmul.bf16.gmra.mxu0 %v209
  %v302 = vpop.f32.mrf.mxu0
  %v303 = vadd.f32 0.0, %v302
  %v304 = vpop.f32.mrf.mxu0
  %v305 = vadd.f32 0.0, %v304
  %306 = vmatmul.bf16.gmra.mxu0 %v210
  %v307 = vpop.f32.mrf.mxu0
  %v308 = vadd.f32 0.0, %v307
  %v309 = vpop.f32.mrf.mxu0
  %v310 = vadd.f32 0.0, %v309
  %311 = vmatmul.bf16.gmra.mxu0 %v211
  %v312 = vpop.f32.mrf.mxu0
  %v313 = vadd.f32 0.0, %v312
  %v314 = vpop.f32.mrf.mxu0
  %v315 = vadd.f32 0.0, %v314
  %316 = vmatmul.bf16.gmra.mxu0 %v212
  %v317 = vpop.f32.mrf.mxu0
  %v318 = vadd.f32 0.0, %v317
  %v319 = vpop.f32.mrf.mxu0
  %v320 = vadd.f32 0.0, %v319
  %321 = vmatmul.bf16.gmra.mxu0 %v213
  %v322 = vpop.f32.mrf.mxu0
  %v323 = vadd.f32 0.0, %v322
  %v324 = vpop.f32.mrf.mxu0
  %v325 = vadd.f32 0.0, %v324
  %326 = vdwg.mxu0
  %v327 = vpack.c.bf16 %v288, %v288
  %v328 = vpack.c.bf16 %v290, %v290
  %v329 = vpack.c.bf16 %v293, %v293
  %v330 = vpack.c.bf16 %v295, %v295
  %v331 = vpack.c.bf16 %v298, %v298
  %v332 = vpack.c.bf16 %v300, %v300
  %v333 = vpack.c.bf16 %v303, %v303
  %v334 = vpack.c.bf16 %v305, %v305
  %v335 = vpack.c.bf16 %v308, %v308
  %v336 = vpack.c.bf16 %v310, %v310
  %v337 = vpack.c.bf16 %v313, %v313
  %v338 = vpack.c.bf16 %v315, %v315
  %v339 = vpack.c.bf16 %v318, %v318
  %v340 = vpack.c.bf16 %v320, %v320
  %v341 = vpack.c.bf16 %v323, %v323
  %v342 = vpack.c.bf16 %v325, %v325
  %343 = vst [vmem:[%s4] sm:$0xf] %v327
  %344 = vst [vmem:[%s4 + $0x4] sm:$0xf] %v328
  %345 = vst [vmem:[%s4 + $0x8] sm:$0xf] %v329
  %346 = vst [vmem:[%s4 + $0xc] sm:$0xf] %v330
  %347 = vst [vmem:[%s4 + $0x10] sm:$0xf] %v331
  %348 = vst [vmem:[%s4 + $0x14] sm:$0xf] %v332
  %349 = vst [vmem:[%s4 + $0x18] sm:$0xf] %v333
  %350 = vst [vmem:[%s4 + $0x1c] sm:$0xf] %v334
  %351 = vst [vmem:[%s4 + $0x20] sm:$0xf] %v335
  %352 = vst [vmem:[%s4 + $0x24] sm:$0xf] %v336
  %353 = vst [vmem:[%s4 + $0x28] sm:$0xf] %v337
  %354 = vst [vmem:[%s4 + $0x2c] sm:$0xf] %v338
  %355 = vst [vmem:[%s4 + $0x30] sm:$0xf] %v339
  %356 = vst [vmem:[%s4 + $0x34] sm:$0xf] %v340
  %357 = vst [vmem:[%s4 + $0x38] sm:$0xf] %v341
  %358 = vst [vmem:[%s4 + $0x3c] sm:$0xf] %v342
  // Predicated region
  $region18: #{gin_forward.3} parent=0 // pred_check
    _
  $region19: #{gin_forward.3} parent=0 // pred_check_branch
    %360 = sbr.rel (0) target = $region21
  $region20: #{gin_forward.3} parent=0 // pred_region
    _
  $region21: #{gin_forward.3} parent=0 // pred_fallthru
    _
  // Predicated region
  $region22: #{gin_forward.3} parent=0 // pred_check
    _
  $region23: #{gin_forward.3} parent=0 // pred_check_branch
    %362 = sbr.rel (0) target = $region25
  $region24: #{gin_forward.3} parent=0 // pred_region
    _
  $region25: #{gin_forward.3} parent=0 // pred_fallthru
    _

// kernel: gin_forward.5
$region0: #{gin_forward.5}
  #allocation0 [shape = 'u32[]', space=smem, size = 0x4, offset = 0x4, fixed_abs, tag = 'smem constant byte address 0x4 - core index']
  #allocation1 [shape = 'u32[72,128]{1,0:T(1,128)}', space=vmem, size = 0x9000, scoped, tag = 'internal scratch']
  %s0 = inlined_call_operand.vmem [shape: f32[1,8,128], index: 0, kind: input, shape index: {}]
  %s1 = inlined_call_operand.vmem [shape: f32[128,128], index: 1, kind: input, shape index: {}]
  %s2 = inlined_call_operand.vmem [shape: f32[1,128], index: 2, kind: input, shape index: {}]
  %s3 = inlined_call_operand.vmem [shape: f32[128,128], index: 3, kind: input, shape index: {}]
  %s4 = inlined_call_operand.vmem [shape: f32[1,128], index: 4, kind: input, shape index: {}]
  %s5 = inlined_call_operand.vmem [shape: f32[8,128], index: 5, kind: output, shape index: {}]
  %s6 = sld [smem:[#allocation0]]
  $region30: #{gin_forward.5} parent=0
    _
  %s8 = ssub.s32 1, %s6
  %s9 = scalar_select 0, %s8, %s6
  // Predicated region
  $region2: #{gin_forward.5} parent=0 // pred_check
    _
  $region3: #{gin_forward.5} parent=0 // pred_check_branch
    %11 = sbr.rel (0) target = $region5
  $region4: #{gin_forward.5} parent=0 // pred_region
    _
  $region5: #{gin_forward.5} parent=0 // pred_fallthru
    _
  // Predicated region
  $region6: #{gin_forward.5} parent=0 // pred_check
    _
  $region7: #{gin_forward.5} parent=0 // pred_check_branch
    %13 = sbr.rel (0) target = $region9
  $region8: #{gin_forward.5} parent=0 // pred_region
    _
  $region9: #{gin_forward.5} parent=0 // pred_fallthru
    _
  // Predicated region
  $region10: #{gin_forward.5} parent=0 // pred_check
    _
  $region11: #{gin_forward.5} parent=0 // pred_check_branch
    %15 = sbr.rel (0) target = $region13
  $region12: #{gin_forward.5} parent=0 // pred_region
    _
  $region13: #{gin_forward.5} parent=0 // pred_fallthru
    _
  // Predicated region
  $region14: #{gin_forward.5} parent=0 // pred_check
    _
  $region15: #{gin_forward.5} parent=0 // pred_check_branch
    %17 = sbr.rel (0) target = $region17
  $region16: #{gin_forward.5} parent=0 // pred_region
    _
  $region17: #{gin_forward.5} parent=0 // pred_fallthru
    _
  // Predicated region
  $region18: #{gin_forward.5} parent=0 // pred_check
    _
  $region19: #{gin_forward.5} parent=0 // pred_check_branch
    %19 = sbr.rel (0) target = $region21
  $region20: #{gin_forward.5} parent=0 // pred_region
    _
  $region21: #{gin_forward.5} parent=0 // pred_fallthru
    _
  %v20 = vld [vmem:[%s0] sm:$0xff]
  %v21 = vadd.f32 %v20, 0.0
  %v22 = vld [vmem:[%s1] sm:$0xff]
  %v23 = vld [vmem:[%s1 + $0x8] sm:$0xff]
  %v24 = vld [vmem:[%s1 + $0x10] sm:$0xff]
  %v25 = vld [vmem:[%s1 + $0x18] sm:$0xff]
  %v26 = vld [vmem:[%s1 + $0x20] sm:$0xff]
  %v27 = vld [vmem:[%s1 + $0x28] sm:$0xff]
  %v28 = vld [vmem:[%s1 + $0x30] sm:$0xff]
  %v29 = vld [vmem:[%s1 + $0x38] sm:$0xff]
  %v30 = vld [vmem:[%s1 + $0x40] sm:$0xff]
  %v31 = vld [vmem:[%s1 + $0x48] sm:$0xff]
  %v32 = vld [vmem:[%s1 + $0x50] sm:$0xff]
  %v33 = vld [vmem:[%s1 + $0x58] sm:$0xff]
  %v34 = vld [vmem:[%s1 + $0x60] sm:$0xff]
  %v35 = vld [vmem:[%s1 + $0x68] sm:$0xff]
  %v36 = vld [vmem:[%s1 + $0x70] sm:$0xff]
  %v37 = vld [vmem:[%s1 + $0x78] sm:$0xff]
  %v38 = vld [vmem:[%s2] sm:$0x1]
  %v40 = vperm.slane %v38, 0
  %42 = vmatpush.msra.mxu0 %v37
  %43 = vmatpush.msra.mxu0 %v36
  %44 = vmatpush.msra.mxu0 %v35
  %45 = vmatpush.msra.mxu0 %v34
  %46 = vmatpush.msra.mxu0 %v33
  %47 = vmatpush.msra.mxu0 %v32
  %48 = vmatpush.msra.mxu0 %v31
  %49 = vmatpush.msra.mxu0 %v30
  %50 = vmatpush.msra.mxu0 %v29
  %51 = vmatpush.msra.mxu0 %v28
  %52 = vmatpush.msra.mxu0 %v27
  %53 = vmatpush.msra.mxu0 %v26
  %54 = vmatpush.msra.mxu0 %v25
  %55 = vmatpush.msra.mxu0 %v24
  %56 = vmatpush.msra.mxu0 %v23
  %57 = vmatpush.msra.mxu0 %v22
  %58 = vmatmul.f32.gmra.mxu0 %v21
  %v59 = vpop.f32.mrf.mxu0
  %v60 = vadd.f32 %v40, %v59
  %61 = vdwg.mxu0
  %v62 = vmax.f32 %v60, 0.0
  %v63 = vld [vmem:[%s3] sm:$0xff]
  %v64 = vld [vmem:[%s3 + $0x8] sm:$0xff]
  %v65 = vld [vmem:[%s3 + $0x10] sm:$0xff]
  %v66 = vld [vmem:[%s3 + $0x18] sm:$0xff]
  %v67 = vld [vmem:[%s3 + $0x20] sm:$0xff]
  %v68 = vld [vmem:[%s3 + $0x28] sm:$0xff]
  %v69 = vld [vmem:[%s3 + $0x30] sm:$0xff]
  %v70 = vld [vmem:[%s3 + $0x38] sm:$0xff]
  %v71 = vld [vmem:[%s3 + $0x40] sm:$0xff]
  %v72 = vld [vmem:[%s3 + $0x48] sm:$0xff]
  %v73 = vld [vmem:[%s3 + $0x50] sm:$0xff]
  %v74 = vld [vmem:[%s3 + $0x58] sm:$0xff]
  %v75 = vld [vmem:[%s3 + $0x60] sm:$0xff]
  %v76 = vld [vmem:[%s3 + $0x68] sm:$0xff]
  %v77 = vld [vmem:[%s3 + $0x70] sm:$0xff]
  %v78 = vld [vmem:[%s3 + $0x78] sm:$0xff]
  %v79 = vld [vmem:[%s4] sm:$0x1]
  %v81 = vperm.slane %v79, 0
  %83 = vmatpush.msra.mxu0 %v78
  %84 = vmatpush.msra.mxu0 %v77
  %85 = vmatpush.msra.mxu0 %v76
  %86 = vmatpush.msra.mxu0 %v75
  %87 = vmatpush.msra.mxu0 %v74
  %88 = vmatpush.msra.mxu0 %v73
  %89 = vmatpush.msra.mxu0 %v72
  %90 = vmatpush.msra.mxu0 %v71
  %91 = vmatpush.msra.mxu0 %v70
  %92 = vmatpush.msra.mxu0 %v69
  %93 = vmatpush.msra.mxu0 %v68
  %94 = vmatpush.msra.mxu0 %v67
  %95 = vmatpush.msra.mxu0 %v66
  %96 = vmatpush.msra.mxu0 %v65
  %97 = vmatpush.msra.mxu0 %v64
  %98 = vmatpush.msra.mxu0 %v63
  %99 = vmatmul.f32.gmra.mxu0 %v62
  %v100 = vpop.f32.mrf.mxu0
  %v101 = vadd.f32 %v81, %v100
  %102 = vdwg.mxu0
  %103 = vst [vmem:[%s5] sm:$0xff] %v101
  // Predicated region
  $region22: #{gin_forward.5} parent=0 // pred_check
    _
  $region23: #{gin_forward.5} parent=0 // pred_check_branch
    %105 = sbr.rel (0) target = $region25
  $region24: #{gin_forward.5} parent=0 // pred_region
    _
  $region25: #{gin_forward.5} parent=0 // pred_fallthru
    _
  // Predicated region
  $region26: #{gin_forward.5} parent=0 // pred_check
    _
  $region27: #{gin_forward.5} parent=0 // pred_check_branch
    %107 = sbr.rel (0) target = $region29
  $region28: #{gin_forward.5} parent=0 // pred_region
    _
  $region29: #{gin_forward.5} parent=0 // pred_fallthru
    _

</llo_original>
